<compile_context>
chip_gen: v6e
topology: v6e:2x2x1
jax: 0.10.0
libtpu: 0.0.40
codegen_flags: <defaults>
</compile_context>

<pallas_src>
import jax
import jax.numpy as jnp
from jax.experimental import pallas as pl
from jax.experimental.pallas import tpu as pltpu


def _round_up(x, m):
    return ((x + m - 1) // m) * m


def fnet_kernel(x_ref, w1_ref, b1_ref, w2_ref, b2_ref, w3_ref, b3_ref, o_ref):
    # Batch-major: x_ref is (TM, z_dim); weights are pre-transposed (in, out);
    # biases are (1, out) so they broadcast over the batch dimension.
    x = x_ref[...]                                                 # f32

    # Layer 1: z_dim -> latent (K = 8; f32 operands, f32 accumulate).
    h = jnp.dot(x, w1_ref[...], preferred_element_type=jnp.float32) + b1_ref[...]
    h = jnp.maximum(h, 0.1 * h)                                    # LeakyReLU(0.1)

    # Layer 2: latent -> latent (the FLOP-heavy matmul; bf16 MXU operands by
    # default, f32 accumulation, f32 bias + activation).
    h = h.astype(w2_ref.dtype)
    h = jnp.dot(h, w2_ref[...], preferred_element_type=jnp.float32) + b2_ref[...]
    h = jnp.maximum(h, 0.1 * h)

    # Layer 3: latent -> z_dim.
    h = h.astype(w3_ref.dtype)
    o = jnp.dot(h, w3_ref[...], preferred_element_type=jnp.float32) + b3_ref[...]

    o_ref[...] = o.astype(o_ref.dtype)


def f_net_forward(z, params, *, tm=4096, compute_dtype=jnp.bfloat16):
    """z: (B, z_dim). params: w1 (L,z), b1 (L,), w2 (L,L), b2 (L,), w3 (z,L), b3 (z,)."""
    B, z_dim = z.shape
    latent = params["w1"].shape[0]
    out_dtype = z.dtype

    # Batch tile: multiple of 128, capped at round_up(B, 128).
    tm = max(128, _round_up(tm, 128))
    TM = min(tm, _round_up(B, 128))
    n_steps = pl.cdiv(B, TM)           # ragged last block handled by Pallas masking

    # Tiny weight transposes (negligible) so the kernel computes x @ W.T as x @ Wt.
    w1_t = params["w1"].T.astype(z.dtype)                 # (z_dim, latent), f32 path
    w2_t = params["w2"].T.astype(compute_dtype)           # (latent, latent)
    w3_t = params["w3"].T.astype(compute_dtype)           # (latent, z_dim)
    b1 = params["b1"].astype(jnp.float32).reshape(1, latent)
    b2 = params["b2"].astype(jnp.float32).reshape(1, latent)
    b3 = params["b3"].astype(jnp.float32).reshape(1, z_dim)

    def _nbytes(a):
        return a.size * a.dtype.itemsize

    rows_padded = n_steps * TM
    flops = 2 * rows_padded * (z_dim * latent + latent * latent + latent * z_dim)
    bytes_accessed = (
        _nbytes(z)
        + sum(_nbytes(t) for t in (w1_t, b1, w2_t, b2, w3_t, b3))
        + B * z_dim * jnp.dtype(out_dtype).itemsize
    )

    out = pl.pallas_call(
        fnet_kernel,
        out_shape=jax.ShapeDtypeStruct((B, z_dim), out_dtype),
        grid=(n_steps,),
        in_specs=[
            pl.BlockSpec((TM, z_dim), lambda i: (i, 0)),        # x tile (pipelined)
            pl.BlockSpec((z_dim, latent), lambda i: (0, 0)),    # w1^T (VMEM-resident)
            pl.BlockSpec((1, latent), lambda i: (0, 0)),        # b1
            pl.BlockSpec((latent, latent), lambda i: (0, 0)),   # w2^T
            pl.BlockSpec((1, latent), lambda i: (0, 0)),        # b2
            pl.BlockSpec((latent, z_dim), lambda i: (0, 0)),    # w3^T
            pl.BlockSpec((1, z_dim), lambda i: (0, 0)),         # b3
        ],
        out_specs=pl.BlockSpec((TM, z_dim), lambda i: (i, 0)),
        compiler_params=pltpu.CompilerParams(
            # TODO(synk): on v7x, confirm the batch axis is actually split across
            # both TensorCores; switch to pltpu.CORE_PARALLEL if a profile shows
            # one TC idle (plain "parallel" is a no-op on single-TC chips).
            dimension_semantics=("parallel",),
            vmem_limit_bytes=48 * 1024 * 1024,
        ),
        cost_estimate=pl.CostEstimate(
            flops=flops, transcendentals=0, bytes_accessed=bytes_accessed),
    )(z, w1_t, b1, w2_t, b2, w3_t, b3)

    return out


def init_params(key, z_dim, latent_dim=128):
    """PyTorch nn.Linear default init: U(-1/sqrt(fan_in), 1/sqrt(fan_in)).
    Weights stored PyTorch-style (out_features, in_features)."""
    def linear(k, fan_in, fan_out):
        kw, kb = jax.random.split(k)
        bound = 1.0 / jnp.sqrt(fan_in)
        w = jax.random.uniform(kw, (fan_out, fan_in), jnp.float32, -bound, bound)
        b = jax.random.uniform(kb, (fan_out,), jnp.float32, -bound, bound)
        return w, b

    k1, k2, k3 = jax.random.split(key, 3)
    w1, b1 = linear(k1, z_dim, latent_dim)
    w2, b2 = linear(k2, latent_dim, latent_dim)
    w3, b3 = linear(k3, latent_dim, z_dim)
    return {"w1": w1, "b1": b1, "w2": w2, "b2": b2, "w3": w3, "b3": b3}


def f_net_reference(z, p):
    """Pure-JAX f32 reference (x @ W.T + b), for validation."""
    h = z @ p["w1"].T + p["b1"]
    h = jnp.where(h > 0, h, 0.1 * h)
    h = h @ p["w2"].T + p["b2"]
    h = jnp.where(h > 0, h, 0.1 * h)
    return h @ p["w3"].T + p["b3"]


if __name__ == "__main__":
    key = jax.random.PRNGKey(0)
    k_param, k_data1, k_data2 = jax.random.split(key, 3)

    z_dim, latent_dim = 8, 128
    params = init_params(k_param, z_dim, latent_dim)

    # 1) Tiny batch (single grid step, block larger than array), pure-f32 path.
    z1 = jax.random.normal(k_data1, (8, z_dim), dtype=jnp.float32)
    out1 = jax.block_until_ready(f_net_forward(z1, params, compute_dtype=jnp.float32))
    ref1 = f_net_reference(z1, params)
    assert out1.shape == (8, z_dim)
    assert jnp.allclose(out1, ref1, atol=1e-4, rtol=1e-4)

    # 2) Ragged batch with a multi-step grid (exercises uneven-block masking
    #    and pipelining), pure-f32 path.
    z2 = jax.random.normal(k_data2, (300, z_dim), dtype=jnp.float32)
    out2 = jax.block_until_ready(
        f_net_forward(z2, params, tm=256, compute_dtype=jnp.float32))
    ref2 = f_net_reference(z2, params)
    assert out2.shape == (300, z_dim)
    assert jnp.allclose(out2, ref2, atol=1e-4, rtol=1e-4)

    # 3) Default path: bf16 MXU operands for layers 2/3, f32 accumulation.
    out3 = jax.block_until_ready(f_net_forward(z2, params))
    assert out3.shape == (300, z_dim)
    assert jnp.allclose(out3, ref2, atol=2e-2, rtol=2e-2)

    print("KERNEL_OK")
</pallas_src>

<mosaic_0001>
module attributes {stable_mosaic.version = 11 : i64} {
  func.func @fnet_kernel(%arg0: i32, %arg1: memref<128x8xf32, #tpu.memory_space<vmem>>, %arg2: memref<8x128xf32, #tpu.memory_space<vmem>>, %arg3: memref<1x128xf32, #tpu.memory_space<vmem>>, %arg4: memref<128x128xf32, #tpu.memory_space<vmem>>, %arg5: memref<1x128xf32, #tpu.memory_space<vmem>>, %arg6: memref<128x8xf32, #tpu.memory_space<vmem>>, %arg7: memref<1x8xf32, #tpu.memory_space<vmem>>, %arg8: memref<128x8xf32, #tpu.memory_space<vmem>>) attributes {dimension_semantics = [#tpu.dimension_semantics<parallel>], iteration_bounds = array<i64: 1>, scalar_prefetch = 0 : i64, scratch_operands = 0 : i64, tpu.core_type = #tpu.core_type<tc>, window_params = [{transform_indices = @transform_0, window_bounds = array<i64: 128, 8>}, {pipeline_mode = #tpu.pipeline_mode<synchronous>, transform_indices = @transform_1, window_bounds = array<i64: 8, 128>}, {pipeline_mode = #tpu.pipeline_mode<synchronous>, transform_indices = @transform_2, window_bounds = array<i64: 1, 128>}, {pipeline_mode = #tpu.pipeline_mode<synchronous>, transform_indices = @transform_3, window_bounds = array<i64: 128, 128>}, {pipeline_mode = #tpu.pipeline_mode<synchronous>, transform_indices = @transform_4, window_bounds = array<i64: 1, 128>}, {pipeline_mode = #tpu.pipeline_mode<synchronous>, transform_indices = @transform_5, window_bounds = array<i64: 128, 8>}, {pipeline_mode = #tpu.pipeline_mode<synchronous>, transform_indices = @transform_6, window_bounds = array<i64: 1, 8>}, {transform_indices = @transform_7, window_bounds = array<i64: 128, 8>}]} {
    %c0 = arith.constant 0 : index
    %c0_0 = arith.constant 0 : index
    %0 = vector.load %arg1[%c0, %c0_0] : memref<128x8xf32, #tpu.memory_space<vmem>>, vector<128x8xf32>
    %c0_1 = arith.constant 0 : index
    %c0_2 = arith.constant 0 : index
    %1 = vector.load %arg2[%c0_1, %c0_2] : memref<8x128xf32, #tpu.memory_space<vmem>>, vector<8x128xf32>
    %cst = arith.constant dense<0.000000e+00> : vector<128x128xf32>
    %2 = tpu.matmul %0, %1, %cst {dimension_numbers = #tpu.dot_dimension_numbers<[1], [0], [0], [1], [0, 0, 1, 1], [], []>} : vector<128x8xf32>, vector<8x128xf32>, vector<128x128xf32> -> vector<128x128xf32>
    %c0_3 = arith.constant 0 : index
    %c0_4 = arith.constant 0 : index
    %3 = vector.load %arg3[%c0_3, %c0_4] : memref<1x128xf32, #tpu.memory_space<vmem>>, vector<1x128xf32>
    %4 = vector.broadcast %3 : vector<1x128xf32> to vector<128x128xf32>
    %5 = arith.addf %2, %4 : vector<128x128xf32>
    %cst_5 = arith.constant 1.000000e-01 : f32
    %6 = vector.broadcast %cst_5 : f32 to vector<128x128xf32>
    %7 = arith.mulf %6, %5 : vector<128x128xf32>
    %8 = arith.maximumf %5, %7 : vector<128x128xf32>
    %c0_6 = arith.constant 0 : index
    %c0_7 = arith.constant 0 : index
    %9 = vector.load %arg4[%c0_6, %c0_7] : memref<128x128xf32, #tpu.memory_space<vmem>>, vector<128x128xf32>
    %cst_8 = arith.constant dense<0.000000e+00> : vector<128x128xf32>
    %10 = tpu.matmul %8, %9, %cst_8 {dimension_numbers = #tpu.dot_dimension_numbers<[1], [0], [0], [1], [0, 0, 1, 1], [], []>} : vector<128x128xf32>, vector<128x128xf32>, vector<128x128xf32> -> vector<128x128xf32>
    %c0_9 = arith.constant 0 : index
    %c0_10 = arith.constant 0 : index
    %11 = vector.load %arg5[%c0_9, %c0_10] : memref<1x128xf32, #tpu.memory_space<vmem>>, vector<1x128xf32>
    %12 = vector.broadcast %11 : vector<1x128xf32> to vector<128x128xf32>
    %13 = arith.addf %10, %12 : vector<128x128xf32>
    %cst_11 = arith.constant 1.000000e-01 : f32
    %14 = vector.broadcast %cst_11 : f32 to vector<128x128xf32>
    %15 = arith.mulf %14, %13 : vector<128x128xf32>
    %16 = arith.maximumf %13, %15 : vector<128x128xf32>
    %c0_12 = arith.constant 0 : index
    %c0_13 = arith.constant 0 : index
    %17 = vector.load %arg6[%c0_12, %c0_13] : memref<128x8xf32, #tpu.memory_space<vmem>>, vector<128x8xf32>
    %cst_14 = arith.constant dense<0.000000e+00> : vector<128x8xf32>
    %18 = tpu.matmul %16, %17, %cst_14 {dimension_numbers = #tpu.dot_dimension_numbers<[1], [0], [0], [1], [0, 0, 1, 1], [], []>} : vector<128x128xf32>, vector<128x8xf32>, vector<128x8xf32> -> vector<128x8xf32>
    %c0_15 = arith.constant 0 : index
    %c0_16 = arith.constant 0 : index
    %19 = vector.load %arg7[%c0_15, %c0_16] : memref<1x8xf32, #tpu.memory_space<vmem>>, vector<1x8xf32>
    %20 = vector.broadcast %19 : vector<1x8xf32> to vector<128x8xf32>
    %21 = arith.addf %18, %20 : vector<128x8xf32>
    %c0_17 = arith.constant 0 : index
    %c0_18 = arith.constant 0 : index
    %22 = vector.load %arg8[%c0_17, %c0_18] : memref<128x8xf32, #tpu.memory_space<vmem>>, vector<128x8xf32>
    tpu.vector_store %arg8[%c0_17, %c0_18], %21 {strides = array<i32>} : memref<128x8xf32, #tpu.memory_space<vmem>>, vector<128x8xf32>,
    return
  }
  func.func @transform_0(%arg0: i32) -> (i32, i32) {
    %c0_i32 = arith.constant 0 : i32
    %c0_i32_0 = arith.constant 0 : i32
    return %arg0, %c0_i32 : i32, i32
  }
  func.func @transform_1(%arg0: i32) -> (i32, i32) {
    %c0_i32 = arith.constant 0 : i32
    %c0_i32_0 = arith.constant 0 : i32
    %c0_i32_1 = arith.constant 0 : i32
    return %c0_i32, %c0_i32_0 : i32, i32
  }
  func.func @transform_2(%arg0: i32) -> (i32, i32) {
    %c0_i32 = arith.constant 0 : i32
    %c0_i32_0 = arith.constant 0 : i32
    %c0_i32_1 = arith.constant 0 : i32
    return %c0_i32, %c0_i32_0 : i32, i32
  }
  func.func @transform_3(%arg0: i32) -> (i32, i32) {
    %c0_i32 = arith.constant 0 : i32
    %c0_i32_0 = arith.constant 0 : i32
    %c0_i32_1 = arith.constant 0 : i32
    return %c0_i32, %c0_i32_0 : i32, i32
  }
  func.func @transform_4(%arg0: i32) -> (i32, i32) {
    %c0_i32 = arith.constant 0 : i32
    %c0_i32_0 = arith.constant 0 : i32
    %c0_i32_1 = arith.constant 0 : i32
    return %c0_i32, %c0_i32_0 : i32, i32
  }
  func.func @transform_5(%arg0: i32) -> (i32, i32) {
    %c0_i32 = arith.constant 0 : i32
    %c0_i32_0 = arith.constant 0 : i32
    %c0_i32_1 = arith.constant 0 : i32
    return %c0_i32, %c0_i32_0 : i32, i32
  }
  func.func @transform_6(%arg0: i32) -> (i32, i32) {
    %c0_i32 = arith.constant 0 : i32
    %c0_i32_0 = arith.constant 0 : i32
    %c0_i32_1 = arith.constant 0 : i32
    return %c0_i32, %c0_i32_0 : i32, i32
  }
  func.func @transform_7(%arg0: i32) -> (i32, i32) {
    %c0_i32 = arith.constant 0 : i32
    %c0_i32_0 = arith.constant 0 : i32
    return %arg0, %c0_i32 : i32, i32
  }
}

</mosaic_0001>

<llo_original>
// kernel: tpu_custom_call.1
$region0: #{tpu_custom_call.1}
  #allocation0 [shape = 'u32[]', space=smem, size = 0x4, offset = 0x4, fixed_abs, tag = 'smem constant byte address 0x4 - core index']
  #allocation1 [shape = 'u32[144,128]{1,0:T(1,128)}', space=vmem, size = 0x12000, scoped, tag = 'internal scratch']
  %s0 = inlined_call_operand.vmem [shape: f32[8,8], index: 0, kind: input, shape index: {}]
  %s1 = inlined_call_operand.hbm [shape: f32[8,128], index: 1, kind: input, shape index: {}]
  %s2 = inlined_call_operand.vmem [shape: f32[1,128], index: 2, kind: input, shape index: {}]
  %s3 = inlined_call_operand.vmem [shape: f32[128,128], index: 3, kind: input, shape index: {}]
  %s4 = inlined_call_operand.hbm [shape: f32[1,128], index: 4, kind: input, shape index: {}]
  %s5 = inlined_call_operand.vmem [shape: f32[128,8], index: 5, kind: input, shape index: {}]
  %s6 = inlined_call_operand.vmem [shape: f32[1,8], index: 6, kind: input, shape index: {}]
  %s7 = inlined_call_operand.hbm [shape: f32[8,8], index: 7, kind: output, shape index: {}]
  %s8 = sld [smem:[#allocation0]]
  $region46: #{tpu_custom_call.1} parent=0
    _
  %s10 = ssub.s32 1, %s8
  %s11 = scalar_select 0, %s10, %s8
  $region1: #{tpu_custom_call.1} parent=0
    #allocation2 [shape = 'u8[4096]{0}', space=vmem, size = 0x1000, scoped, tag = 'input window, operand 1, single buffered']
    #allocation3 [shape = 's32[1]{0}', space=sflag, size = 0x4, scoped, tag = 'scoped memory for tpu_custom_call.1']
    #allocation4 [shape = 's32[1]{0}', space=sflag, size = 0x4, scoped, tag = 'scoped memory for tpu_custom_call.1']
    #allocation5 [shape = 'u8[512]{0}', space=vmem, size = 0x400, scoped, tag = 'input window, operand 4, single buffered']
    #allocation6 [shape = 's32[1]{0}', space=sflag, size = 0x4, scoped, tag = 'scoped memory for tpu_custom_call.1']
    #allocation7 [shape = 'u8[65536]{0}', space=vmem, size = 0x10000, scoped, tag = 'output window, operand 0, single buffered']
    %12 = vsyncpa [#allocation3], 0
    %13 = vsyncpa [#allocation6], 0
    %14 = vsyncpa [#allocation4], 0
    // Predicated region
    $region2: #{tpu_custom_call.1} parent=1 // pred_check
      _
    $region3: #{tpu_custom_call.1} parent=1 // pred_check_branch
      %16 = sbr.rel (0) target = $region5
    $region4: #{tpu_custom_call.1} parent=1 // pred_region
      _
    $region5: #{tpu_custom_call.1} parent=1 // pred_fallthru
      _
    // Predicated region
    $region6: #{tpu_custom_call.1} parent=1 // pred_check
      _
    $region7: #{tpu_custom_call.1} parent=1 // pred_check_branch
      %18 = sbr.rel (0) target = $region9
    $region8: #{tpu_custom_call.1} parent=1 // pred_region
      %s20 = ssub.s32 128, 128
      %21 = vsyncadd [#allocation3], %s20
      %s23 = sshll.u32 [#allocation2], 4
      %s24 = int_to_ptr.vmem [resolvable:$true] %s23
      %26 = dma.hbm_to_vmem [thread:$0]  %s1, 128, %s24, [#allocation3]
    $region9: #{tpu_custom_call.1} parent=1 // pred_fallthru
      _
    // Predicated region
    $region10: #{tpu_custom_call.1} parent=1 // pred_check
      _
    $region11: #{tpu_custom_call.1} parent=1 // pred_check_branch
      %28 = sbr.rel (0) target = $region13
    $region12: #{tpu_custom_call.1} parent=1 // pred_region
      _
    $region13: #{tpu_custom_call.1} parent=1 // pred_fallthru
      _
    // Predicated region
    $region14: #{tpu_custom_call.1} parent=1 // pred_check
      _
    $region15: #{tpu_custom_call.1} parent=1 // pred_check_branch
      %30 = sbr.rel (0) target = $region17
    $region16: #{tpu_custom_call.1} parent=1 // pred_region
      _
    $region17: #{tpu_custom_call.1} parent=1 // pred_fallthru
      _
    // Predicated region
    $region18: #{tpu_custom_call.1} parent=1 // pred_check
      _
    $region19: #{tpu_custom_call.1} parent=1 // pred_check_branch
      %32 = sbr.rel (0) target = $region21
    $region20: #{tpu_custom_call.1} parent=1 // pred_region
      %s34 = ssub.s32 16, 16
      %35 = vsyncadd [#allocation6], %s34
      %s37 = sshll.u32 [#allocation5], 4
      %s38 = int_to_ptr.vmem [resolvable:$true] %s37
      %40 = dma.hbm_to_vmem [thread:$0]  %s4, 16, %s38, [#allocation6]
    $region21: #{tpu_custom_call.1} parent=1 // pred_fallthru
      _
    // Predicated region
    $region22: #{tpu_custom_call.1} parent=1 // pred_check
      _
    $region23: #{tpu_custom_call.1} parent=1 // pred_check_branch
      %42 = sbr.rel (0) target = $region25
    $region24: #{tpu_custom_call.1} parent=1 // pred_region
      _
    $region25: #{tpu_custom_call.1} parent=1 // pred_fallthru
      _
    // Predicated region
    $region26: #{tpu_custom_call.1} parent=1 // pred_check
      _
    $region27: #{tpu_custom_call.1} parent=1 // pred_check_branch
      %44 = sbr.rel (0) target = $region29
    $region28: #{tpu_custom_call.1} parent=1 // pred_region
      _
    $region29: #{tpu_custom_call.1} parent=1 // pred_fallthru
      _
    // Predicated region
    $region30: #{tpu_custom_call.1} parent=1 // pred_check
      _
    $region31: #{tpu_custom_call.1} parent=1 // pred_check_branch
      %46 = sbr.rel (0) target = $region33
    $region32: #{tpu_custom_call.1} parent=1 // pred_region
      %47 = dma.done [#allocation3], 128
    $region33: #{tpu_custom_call.1} parent=1 // pred_fallthru
      _
    // Predicated region
    $region34: #{tpu_custom_call.1} parent=1 // pred_check
      _
    $region35: #{tpu_custom_call.1} parent=1 // pred_check_branch
      %49 = sbr.rel (0) target = $region37
    $region36: #{tpu_custom_call.1} parent=1 // pred_region
      %50 = dma.done [#allocation6], 16
    $region37: #{tpu_custom_call.1} parent=1 // pred_fallthru
      _
    %v51 = vld [vmem:[%s0] sm:$0xff]
    %v52 = vld [vmem:[%s0 + $0x8] sm:$0xff]
    %v53 = vld [vmem:[%s0 + $0x10] sm:$0xff]
    %v54 = vld [vmem:[%s0 + $0x18] sm:$0xff]
    %v55 = vld [vmem:[%s0 + $0x20] sm:$0xff]
    %v56 = vld [vmem:[%s0 + $0x28] sm:$0xff]
    %v57 = vld [vmem:[%s0 + $0x30] sm:$0xff]
    %v58 = vld [vmem:[%s0 + $0x38] sm:$0xff]
    %v59 = vld [vmem:[%s0 + $0x40] sm:$0xff]
    %v60 = vld [vmem:[%s0 + $0x48] sm:$0xff]
    %v61 = vld [vmem:[%s0 + $0x50] sm:$0xff]
    %v62 = vld [vmem:[%s0 + $0x58] sm:$0xff]
    %v63 = vld [vmem:[%s0 + $0x60] sm:$0xff]
    %v64 = vld [vmem:[%s0 + $0x68] sm:$0xff]
    %v65 = vld [vmem:[%s0 + $0x70] sm:$0xff]
    %v66 = vld [vmem:[%s0 + $0x78] sm:$0xff]
    %v67 = vld [vmem:[#allocation2] sm:$0xff]
    %v68 = vld [vmem:[%s2] sm:$0x1]
    %v70 = vlaneseq
    %v71 = vshrl.u32 %v70, 7
    %v72 = vsub.s32 0, %v71
    %v73 = vrot.slane %v68, %v72
    %vm75 = vcmask 64512
    %v77 = vsel %vm75, %v51, 0
    %v80 = vsel %vm75, %v52, 0
    %v83 = vsel %vm75, %v53, 0
    %v86 = vsel %vm75, %v54, 0
    %v89 = vsel %vm75, %v55, 0
    %v92 = vsel %vm75, %v56, 0
    %v95 = vsel %vm75, %v57, 0
    %v98 = vsel %vm75, %v58, 0
    %v101 = vsel %vm75, %v59, 0
    %v104 = vsel %vm75, %v60, 0
    %v107 = vsel %vm75, %v61, 0
    %v110 = vsel %vm75, %v62, 0
    %v113 = vsel %vm75, %v63, 0
    %v116 = vsel %vm75, %v64, 0
    %v119 = vsel %vm75, %v65, 0
    %v122 = vsel %vm75, %v66, 0
    %124 = vmatprep.subr.mxu0 0.0
    %125 = vmatpush1.msra.mxu0 0.0
    %126 = vmatprep.subr.mxu0 0.0
    %127 = vmatpush1.msra.mxu0 0.0
    %128 = vmatprep.subr.mxu0 0.0
    %129 = vmatpush1.msra.mxu0 0.0
    %130 = vmatprep.subr.mxu0 0.0
    %131 = vmatpush1.msra.mxu0 0.0
    %132 = vmatprep.subr.mxu0 0.0
    %133 = vmatpush1.msra.mxu0 0.0
    %134 = vmatprep.subr.mxu0 0.0
    %135 = vmatpush1.msra.mxu0 0.0
    %136 = vmatprep.subr.mxu0 0.0
    %137 = vmatpush1.msra.mxu0 0.0
    %138 = vmatprep.subr.mxu0 0.0
    %139 = vmatpush1.msra.mxu0 0.0
    %140 = vmatprep.subr.mxu0 0.0
    %141 = vmatpush1.msra.mxu0 0.0
    %142 = vmatprep.subr.mxu0 0.0
    %143 = vmatpush1.msra.mxu0 0.0
    %144 = vmatprep.subr.mxu0 0.0
    %145 = vmatpush1.msra.mxu0 0.0
    %146 = vmatprep.subr.mxu0 0.0
    %147 = vmatpush1.msra.mxu0 0.0
    %148 = vmatprep.subr.mxu0 0.0
    %149 = vmatpush1.msra.mxu0 0.0
    %150 = vmatprep.subr.mxu0 0.0
    %151 = vmatpush1.msra.mxu0 0.0
    %152 = vmatprep.subr.mxu0 0.0
    %153 = vmatpush1.msra.mxu0 0.0
    %154 = vmatprep.subr.mxu0 0.0
    %155 = vmatpush1.msra.mxu0 %v67
    %156 = vmatprep.subr.mxu0 0.0
    %157 = vmatpush2.msra.mxu0 0.0
    %158 = vmatprep.subr.mxu0 0.0
    %159 = vmatpush2.msra.mxu0 0.0
    %160 = vmatprep.subr.mxu0 0.0
    %161 = vmatpush2.msra.mxu0 0.0
    %162 = vmatprep.subr.mxu0 0.0
    %163 = vmatpush2.msra.mxu0 0.0
    %164 = vmatprep.subr.mxu0 0.0
    %165 = vmatpush2.msra.mxu0 0.0
    %166 = vmatprep.subr.mxu0 0.0
    %167 = vmatpush2.msra.mxu0 0.0
    %168 = vmatprep.subr.mxu0 0.0
    %169 = vmatpush2.msra.mxu0 0.0
    %170 = vmatprep.subr.mxu0 0.0
    %171 = vmatpush2.msra.mxu0 0.0
    %172 = vmatprep.subr.mxu0 0.0
    %173 = vmatpush2.msra.mxu0 0.0
    %174 = vmatprep.subr.mxu0 0.0
    %175 = vmatpush2.msra.mxu0 0.0
    %176 = vmatprep.subr.mxu0 0.0
    %177 = vmatpush2.msra.mxu0 0.0
    %178 = vmatprep.subr.mxu0 0.0
    %179 = vmatpush2.msra.mxu0 0.0
    %180 = vmatprep.subr.mxu0 0.0
    %181 = vmatpush2.msra.mxu0 0.0
    %182 = vmatprep.subr.mxu0 0.0
    %183 = vmatpush2.msra.mxu0 0.0
    %184 = vmatprep.subr.mxu0 0.0
    %185 = vmatpush2.msra.mxu0 0.0
    %186 = vmatprep.subr.mxu0 0.0
    %187 = vmatpush2.msra.mxu0 0.0
    %188 = vmatprep.mubr.f32.mxu0 0.0
    %189 = vmatmul.mubr.f32.gmra.mxu0 %v77
    %v190 = vpop.f32.mrf.mxu0
    %v191 = vadd.f32 %v73, %v190
    %v192 = vpop.f32.mrf.mxu0
    %193 = vmatprep.mubr.f32.mxu0 0.0
    %194 = vmatmul.mubr.f32.gmra.mxu0 %v80
    %v195 = vpop.f32.mrf.mxu0
    %v196 = vadd.f32 %v73, %v195
    %v197 = vpop.f32.mrf.mxu0
    %198 = vmatprep.mubr.f32.mxu0 0.0
    %199 = vmatmul.mubr.f32.gmra.mxu0 %v83
    %v200 = vpop.f32.mrf.mxu0
    %v201 = vadd.f32 %v73, %v200
    %v202 = vpop.f32.mrf.mxu0
    %203 = vmatprep.mubr.f32.mxu0 0.0
    %204 = vmatmul.mubr.f32.gmra.mxu0 %v86
    %v205 = vpop.f32.mrf.mxu0
    %v206 = vadd.f32 %v73, %v205
    %v207 = vpop.f32.mrf.mxu0
    %208 = vmatprep.mubr.f32.mxu0 0.0
    %209 = vmatmul.mubr.f32.gmra.mxu0 %v89
    %v210 = vpop.f32.mrf.mxu0
    %v211 = vadd.f32 %v73, %v210
    %v212 = vpop.f32.mrf.mxu0
    %213 = vmatprep.mubr.f32.mxu0 0.0
    %214 = vmatmul.mubr.f32.gmra.mxu0 %v92
    %v215 = vpop.f32.mrf.mxu0
    %v216 = vadd.f32 %v73, %v215
    %v217 = vpop.f32.mrf.mxu0
    %218 = vmatprep.mubr.f32.mxu0 0.0
    %219 = vmatmul.mubr.f32.gmra.mxu0 %v95
    %v220 = vpop.f32.mrf.mxu0
    %v221 = vadd.f32 %v73, %v220
    %v222 = vpop.f32.mrf.mxu0
    %223 = vmatprep.mubr.f32.mxu0 0.0
    %224 = vmatmul.mubr.f32.gmra.mxu0 %v98
    %v225 = vpop.f32.mrf.mxu0
    %v226 = vadd.f32 %v73, %v225
    %v227 = vpop.f32.mrf.mxu0
    %228 = vmatprep.mubr.f32.mxu0 0.0
    %229 = vmatmul.mubr.f32.gmra.mxu0 %v101
    %v230 = vpop.f32.mrf.mxu0
    %v231 = vadd.f32 %v73, %v230
    %v232 = vpop.f32.mrf.mxu0
    %233 = vmatprep.mubr.f32.mxu0 0.0
    %234 = vmatmul.mubr.f32.gmra.mxu0 %v104
    %v235 = vpop.f32.mrf.mxu0
    %v236 = vadd.f32 %v73, %v235
    %v237 = vpop.f32.mrf.mxu0
    %238 = vmatprep.mubr.f32.mxu0 0.0
    %239 = vmatmul.mubr.f32.gmra.mxu0 %v107
    %v240 = vpop.f32.mrf.mxu0
    %v241 = vadd.f32 %v73, %v240
    %v242 = vpop.f32.mrf.mxu0
    %243 = vmatprep.mubr.f32.mxu0 0.0
    %244 = vmatmul.mubr.f32.gmra.mxu0 %v110
    %v245 = vpop.f32.mrf.mxu0
    %v246 = vadd.f32 %v73, %v245
    %v247 = vpop.f32.mrf.mxu0
    %248 = vmatprep.mubr.f32.mxu0 0.0
    %249 = vmatmul.mubr.f32.gmra.mxu0 %v113
    %v250 = vpop.f32.mrf.mxu0
    %v251 = vadd.f32 %v73, %v250
    %v252 = vpop.f32.mrf.mxu0
    %253 = vmatprep.mubr.f32.mxu0 0.0
    %254 = vmatmul.mubr.f32.gmra.mxu0 %v116
    %v255 = vpop.f32.mrf.mxu0
    %v256 = vadd.f32 %v73, %v255
    %v257 = vpop.f32.mrf.mxu0
    %258 = vmatprep.mubr.f32.mxu0 0.0
    %259 = vmatmul.mubr.f32.gmra.mxu0 %v119
    %v260 = vpop.f32.mrf.mxu0
    %v261 = vadd.f32 %v73, %v260
    %v262 = vpop.f32.mrf.mxu0
    %263 = vmatprep.mubr.f32.mxu0 0.0
    %264 = vmatmul.mubr.f32.gmra.mxu0 %v122
    %v265 = vpop.f32.mrf.mxu0
    %v266 = vadd.f32 %v73, %v265
    %v267 = vpop.f32.mrf.mxu0
    %268 = vdwg.mxu0
    %v269 = vmul.f32 %v191, 0.1
    %v270 = vmul.f32 %v196, 0.1
    %v271 = vmul.f32 %v201, 0.1
    %v272 = vmul.f32 %v206, 0.1
    %v273 = vmul.f32 %v211, 0.1
    %v274 = vmul.f32 %v216, 0.1
    %v275 = vmul.f32 %v221, 0.1
    %v276 = vmul.f32 %v226, 0.1
    %v277 = vmul.f32 %v231, 0.1
    %v278 = vmul.f32 %v236, 0.1
    %v279 = vmul.f32 %v241, 0.1
    %v280 = vmul.f32 %v246, 0.1
    %v281 = vmul.f32 %v251, 0.1
    %v282 = vmul.f32 %v256, 0.1
    %v283 = vmul.f32 %v261, 0.1
    %v284 = vmul.f32 %v266, 0.1
    %v285 = vmax.f32 %v191, %v269
    %v286 = vmax.f32 %v196, %v270
    %v287 = vmax.f32 %v201, %v271
    %v288 = vmax.f32 %v206, %v272
    %v289 = vmax.f32 %v211, %v273
    %v290 = vmax.f32 %v216, %v274
    %v291 = vmax.f32 %v221, %v275
    %v292 = vmax.f32 %v226, %v276
    %v293 = vmax.f32 %v231, %v277
    %v294 = vmax.f32 %v236, %v278
    %v295 = vmax.f32 %v241, %v279
    %v296 = vmax.f32 %v246, %v280
    %v297 = vmax.f32 %v251, %v281
    %v298 = vmax.f32 %v256, %v282
    %v299 = vmax.f32 %v261, %v283
    %v300 = vmax.f32 %v266, %v284
    %v301 = vld [vmem:[%s3] sm:$0xff]
    %v302 = vld [vmem:[%s3 + $0x8] sm:$0xff]
    %v303 = vld [vmem:[%s3 + $0x10] sm:$0xff]
    %v304 = vld [vmem:[%s3 + $0x18] sm:$0xff]
    %v305 = vld [vmem:[%s3 + $0x20] sm:$0xff]
    %v306 = vld [vmem:[%s3 + $0x28] sm:$0xff]
    %v307 = vld [vmem:[%s3 + $0x30] sm:$0xff]
    %v308 = vld [vmem:[%s3 + $0x38] sm:$0xff]
    %v309 = vld [vmem:[%s3 + $0x40] sm:$0xff]
    %v310 = vld [vmem:[%s3 + $0x48] sm:$0xff]
    %v311 = vld [vmem:[%s3 + $0x50] sm:$0xff]
    %v312 = vld [vmem:[%s3 + $0x58] sm:$0xff]
    %v313 = vld [vmem:[%s3 + $0x60] sm:$0xff]
    %v314 = vld [vmem:[%s3 + $0x68] sm:$0xff]
    %v315 = vld [vmem:[%s3 + $0x70] sm:$0xff]
    %v316 = vld [vmem:[%s3 + $0x78] sm:$0xff]
    %v317 = vld [vmem:[#allocation5] sm:$0x1]
    %v319 = vlaneseq
    %v320 = vshrl.u32 %v319, 7
    %v321 = vsub.s32 0, %v320
    %v322 = vrot.slane %v317, %v321
    %324 = vmatprep.subr.mxu0 0.0
    %325 = vmatpush1.msra.mxu0 %v316
    %326 = vmatprep.subr.mxu0 0.0
    %327 = vmatpush1.msra.mxu0 %v315
    %328 = vmatprep.subr.mxu0 0.0
    %329 = vmatpush1.msra.mxu0 %v314
    %330 = vmatprep.subr.mxu0 0.0
    %331 = vmatpush1.msra.mxu0 %v313
    %332 = vmatprep.subr.mxu0 0.0
    %333 = vmatpush1.msra.mxu0 %v312
    %334 = vmatprep.subr.mxu0 0.0
    %335 = vmatpush1.msra.mxu0 %v311
    %336 = vmatprep.subr.mxu0 0.0
    %337 = vmatpush1.msra.mxu0 %v310
    %338 = vmatprep.subr.mxu0 0.0
    %339 = vmatpush1.msra.mxu0 %v309
    %340 = vmatprep.subr.mxu0 0.0
    %341 = vmatpush1.msra.mxu0 %v308
    %342 = vmatprep.subr.mxu0 0.0
    %343 = vmatpush1.msra.mxu0 %v307
    %344 = vmatprep.subr.mxu0 0.0
    %345 = vmatpush1.msra.mxu0 %v306
    %346 = vmatprep.subr.mxu0 0.0
    %347 = vmatpush1.msra.mxu0 %v305
    %348 = vmatprep.subr.mxu0 0.0
    %349 = vmatpush1.msra.mxu0 %v304
    %350 = vmatprep.subr.mxu0 0.0
    %351 = vmatpush1.msra.mxu0 %v303
    %352 = vmatprep.subr.mxu0 0.0
    %353 = vmatpush1.msra.mxu0 %v302
    %354 = vmatprep.subr.mxu0 0.0
    %355 = vmatpush1.msra.mxu0 %v301
    %356 = vmatprep.subr.mxu0 0.0
    %357 = vmatpush2.msra.mxu0 0.0
    %358 = vmatprep.subr.mxu0 0.0
    %359 = vmatpush2.msra.mxu0 0.0
    %360 = vmatprep.subr.mxu0 0.0
    %361 = vmatpush2.msra.mxu0 0.0
    %362 = vmatprep.subr.mxu0 0.0
    %363 = vmatpush2.msra.mxu0 0.0
    %364 = vmatprep.subr.mxu0 0.0
    %365 = vmatpush2.msra.mxu0 0.0
    %366 = vmatprep.subr.mxu0 0.0
    %367 = vmatpush2.msra.mxu0 0.0
    %368 = vmatprep.subr.mxu0 0.0
    %369 = vmatpush2.msra.mxu0 0.0
    %370 = vmatprep.subr.mxu0 0.0
    %371 = vmatpush2.msra.mxu0 0.0
    %372 = vmatprep.subr.mxu0 0.0
    %373 = vmatpush2.msra.mxu0 0.0
    %374 = vmatprep.subr.mxu0 0.0
    %375 = vmatpush2.msra.mxu0 0.0
    %376 = vmatprep.subr.mxu0 0.0
    %377 = vmatpush2.msra.mxu0 0.0
    %378 = vmatprep.subr.mxu0 0.0
    %379 = vmatpush2.msra.mxu0 0.0
    %380 = vmatprep.subr.mxu0 0.0
    %381 = vmatpush2.msra.mxu0 0.0
    %382 = vmatprep.subr.mxu0 0.0
    %383 = vmatpush2.msra.mxu0 0.0
    %384 = vmatprep.subr.mxu0 0.0
    %385 = vmatpush2.msra.mxu0 0.0
    %386 = vmatprep.subr.mxu0 0.0
    %387 = vmatpush2.msra.mxu0 0.0
    %388 = vmatprep.mubr.f32.mxu0 0.0
    %389 = vmatmul.mubr.f32.gmra.mxu0 %v285
    %v390 = vpop.f32.mrf.mxu0
    %v391 = vadd.f32 %v322, %v390
    %v392 = vpop.f32.mrf.mxu0
    %393 = vmatprep.mubr.f32.mxu0 0.0
    %394 = vmatmul.mubr.f32.gmra.mxu0 %v286
    %v395 = vpop.f32.mrf.mxu0
    %v396 = vadd.f32 %v322, %v395
    %v397 = vpop.f32.mrf.mxu0
    %398 = vmatprep.mubr.f32.mxu0 0.0
    %399 = vmatmul.mubr.f32.gmra.mxu0 %v287
    %v400 = vpop.f32.mrf.mxu0
    %v401 = vadd.f32 %v322, %v400
    %v402 = vpop.f32.mrf.mxu0
    %403 = vmatprep.mubr.f32.mxu0 0.0
    %404 = vmatmul.mubr.f32.gmra.mxu0 %v288
    %v405 = vpop.f32.mrf.mxu0
    %v406 = vadd.f32 %v322, %v405
    %v407 = vpop.f32.mrf.mxu0
    %408 = vmatprep.mubr.f32.mxu0 0.0
    %409 = vmatmul.mubr.f32.gmra.mxu0 %v289
    %v410 = vpop.f32.mrf.mxu0
    %v411 = vadd.f32 %v322, %v410
    %v412 = vpop.f32.mrf.mxu0
    %413 = vmatprep.mubr.f32.mxu0 0.0
    %414 = vmatmul.mubr.f32.gmra.mxu0 %v290
    %v415 = vpop.f32.mrf.mxu0
    %v416 = vadd.f32 %v322, %v415
    %v417 = vpop.f32.mrf.mxu0
    %418 = vmatprep.mubr.f32.mxu0 0.0
    %419 = vmatmul.mubr.f32.gmra.mxu0 %v291
    %v420 = vpop.f32.mrf.mxu0
    %v421 = vadd.f32 %v322, %v420
    %v422 = vpop.f32.mrf.mxu0
    %423 = vmatprep.mubr.f32.mxu0 0.0
    %424 = vmatmul.mubr.f32.gmra.mxu0 %v292
    %v425 = vpop.f32.mrf.mxu0
    %v426 = vadd.f32 %v322, %v425
    %v427 = vpop.f32.mrf.mxu0
    %428 = vmatprep.mubr.f32.mxu0 0.0
    %429 = vmatmul.mubr.f32.gmra.mxu0 %v293
    %v430 = vpop.f32.mrf.mxu0
    %v431 = vadd.f32 %v322, %v430
    %v432 = vpop.f32.mrf.mxu0
    %433 = vmatprep.mubr.f32.mxu0 0.0
    %434 = vmatmul.mubr.f32.gmra.mxu0 %v294
    %v435 = vpop.f32.mrf.mxu0
    %v436 = vadd.f32 %v322, %v435
    %v437 = vpop.f32.mrf.mxu0
    %438 = vmatprep.mubr.f32.mxu0 0.0
    %439 = vmatmul.mubr.f32.gmra.mxu0 %v295
    %v440 = vpop.f32.mrf.mxu0
    %v441 = vadd.f32 %v322, %v440
    %v442 = vpop.f32.mrf.mxu0
    %443 = vmatprep.mubr.f32.mxu0 0.0
    %444 = vmatmul.mubr.f32.gmra.mxu0 %v296
    %v445 = vpop.f32.mrf.mxu0
    %v446 = vadd.f32 %v322, %v445
    %v447 = vpop.f32.mrf.mxu0
    %448 = vmatprep.mubr.f32.mxu0 0.0
    %449 = vmatmul.mubr.f32.gmra.mxu0 %v297
    %v450 = vpop.f32.mrf.mxu0
    %v451 = vadd.f32 %v322, %v450
    %v452 = vpop.f32.mrf.mxu0
    %453 = vmatprep.mubr.f32.mxu0 0.0
    %454 = vmatmul.mubr.f32.gmra.mxu0 %v298
    %v455 = vpop.f32.mrf.mxu0
    %v456 = vadd.f32 %v322, %v455
    %v457 = vpop.f32.mrf.mxu0
    %458 = vmatprep.mubr.f32.mxu0 0.0
    %459 = vmatmul.mubr.f32.gmra.mxu0 %v299
    %v460 = vpop.f32.mrf.mxu0
    %v461 = vadd.f32 %v322, %v460
    %v462 = vpop.f32.mrf.mxu0
    %463 = vmatprep.mubr.f32.mxu0 0.0
    %464 = vmatmul.mubr.f32.gmra.mxu0 %v300
    %v465 = vpop.f32.mrf.mxu0
    %v466 = vadd.f32 %v322, %v465
    %v467 = vpop.f32.mrf.mxu0
    %468 = vdwg.mxu0
    %v469 = vmul.f32 %v391, 0.1
    %v470 = vmul.f32 %v396, 0.1
    %v471 = vmul.f32 %v401, 0.1
    %v472 = vmul.f32 %v406, 0.1
    %v473 = vmul.f32 %v411, 0.1
    %v474 = vmul.f32 %v416, 0.1
    %v475 = vmul.f32 %v421, 0.1
    %v476 = vmul.f32 %v426, 0.1
    %v477 = vmul.f32 %v431, 0.1
    %v478 = vmul.f32 %v436, 0.1
    %v479 = vmul.f32 %v441, 0.1
    %v480 = vmul.f32 %v446, 0.1
    %v481 = vmul.f32 %v451, 0.1
    %v482 = vmul.f32 %v456, 0.1
    %v483 = vmul.f32 %v461, 0.1
    %v484 = vmul.f32 %v466, 0.1
    %v485 = vmax.f32 %v391, %v469
    %v486 = vmax.f32 %v396, %v470
    %v487 = vmax.f32 %v401, %v471
    %v488 = vmax.f32 %v406, %v472
    %v489 = vmax.f32 %v411, %v473
    %v490 = vmax.f32 %v416, %v474
    %v491 = vmax.f32 %v421, %v475
    %v492 = vmax.f32 %v426, %v476
    %v493 = vmax.f32 %v431, %v477
    %v494 = vmax.f32 %v436, %v478
    %v495 = vmax.f32 %v441, %v479
    %v496 = vmax.f32 %v446, %v480
    %v497 = vmax.f32 %v451, %v481
    %v498 = vmax.f32 %v456, %v482
    %v499 = vmax.f32 %v461, %v483
    %v500 = vmax.f32 %v466, %v484
    %v501 = vld [vmem:[%s5] sm:$0xff]
    %v502 = vld [vmem:[%s5 + $0x8] sm:$0xff]
    %v503 = vld [vmem:[%s5 + $0x10] sm:$0xff]
    %v504 = vld [vmem:[%s5 + $0x18] sm:$0xff]
    %v505 = vld [vmem:[%s5 + $0x20] sm:$0xff]
    %v506 = vld [vmem:[%s5 + $0x28] sm:$0xff]
    %v507 = vld [vmem:[%s5 + $0x30] sm:$0xff]
    %v508 = vld [vmem:[%s5 + $0x38] sm:$0xff]
    %v509 = vld [vmem:[%s5 + $0x40] sm:$0xff]
    %v510 = vld [vmem:[%s5 + $0x48] sm:$0xff]
    %v511 = vld [vmem:[%s5 + $0x50] sm:$0xff]
    %v512 = vld [vmem:[%s5 + $0x58] sm:$0xff]
    %v513 = vld [vmem:[%s5 + $0x60] sm:$0xff]
    %v514 = vld [vmem:[%s5 + $0x68] sm:$0xff]
    %v515 = vld [vmem:[%s5 + $0x70] sm:$0xff]
    %v516 = vld [vmem:[%s5 + $0x78] sm:$0xff]
    %v517 = vld [vmem:[%s6] sm:$0x1]
    %v519 = vlaneseq
    %v520 = vshrl.u32 %v519, 7
    %v521 = vsub.s32 0, %v520
    %v522 = vrot.slane %v517, %v521
    %524 = vmatprep.subr.mxu0 0.0
    %525 = vmatpush1.msra.mxu0 %v516
    %526 = vmatprep.subr.mxu0 0.0
    %527 = vmatpush1.msra.mxu0 %v515
    %528 = vmatprep.subr.mxu0 0.0
    %529 = vmatpush1.msra.mxu0 %v514
    %530 = vmatprep.subr.mxu0 0.0
    %531 = vmatpush1.msra.mxu0 %v513
    %532 = vmatprep.subr.mxu0 0.0
    %533 = vmatpush1.msra.mxu0 %v512
    %534 = vmatprep.subr.mxu0 0.0
    %535 = vmatpush1.msra.mxu0 %v511
    %536 = vmatprep.subr.mxu0 0.0
    %537 = vmatpush1.msra.mxu0 %v510
    %538 = vmatprep.subr.mxu0 0.0
    %539 = vmatpush1.msra.mxu0 %v509
    %540 = vmatprep.subr.mxu0 0.0
    %541 = vmatpush1.msra.mxu0 %v508
    %542 = vmatprep.subr.mxu0 0.0
    %543 = vmatpush1.msra.mxu0 %v507
    %544 = vmatprep.subr.mxu0 0.0
    %545 = vmatpush1.msra.mxu0 %v506
    %546 = vmatprep.subr.mxu0 0.0
    %547 = vmatpush1.msra.mxu0 %v505
    %548 = vmatprep.subr.mxu0 0.0
    %549 = vmatpush1.msra.mxu0 %v504
    %550 = vmatprep.subr.mxu0 0.0
    %551 = vmatpush1.msra.mxu0 %v503
    %552 = vmatprep.subr.mxu0 0.0
    %553 = vmatpush1.msra.mxu0 %v502
    %554 = vmatprep.subr.mxu0 0.0
    %555 = vmatpush1.msra.mxu0 %v501
    %556 = vmatprep.subr.mxu0 0.0
    %557 = vmatpush2.msra.mxu0 0.0
    %558 = vmatprep.subr.mxu0 0.0
    %559 = vmatpush2.msra.mxu0 0.0
    %560 = vmatprep.subr.mxu0 0.0
    %561 = vmatpush2.msra.mxu0 0.0
    %562 = vmatprep.subr.mxu0 0.0
    %563 = vmatpush2.msra.mxu0 0.0
    %564 = vmatprep.subr.mxu0 0.0
    %565 = vmatpush2.msra.mxu0 0.0
    %566 = vmatprep.subr.mxu0 0.0
    %567 = vmatpush2.msra.mxu0 0.0
    %568 = vmatprep.subr.mxu0 0.0
    %569 = vmatpush2.msra.mxu0 0.0
    %570 = vmatprep.subr.mxu0 0.0
    %571 = vmatpush2.msra.mxu0 0.0
    %572 = vmatprep.subr.mxu0 0.0
    %573 = vmatpush2.msra.mxu0 0.0
    %574 = vmatprep.subr.mxu0 0.0
    %575 = vmatpush2.msra.mxu0 0.0
    %576 = vmatprep.subr.mxu0 0.0
    %577 = vmatpush2.msra.mxu0 0.0
    %578 = vmatprep.subr.mxu0 0.0
    %579 = vmatpush2.msra.mxu0 0.0
    %580 = vmatprep.subr.mxu0 0.0
    %581 = vmatpush2.msra.mxu0 0.0
    %582 = vmatprep.subr.mxu0 0.0
    %583 = vmatpush2.msra.mxu0 0.0
    %584 = vmatprep.subr.mxu0 0.0
    %585 = vmatpush2.msra.mxu0 0.0
    %586 = vmatprep.subr.mxu0 0.0
    %587 = vmatpush2.msra.mxu0 0.0
    %588 = vmatprep.mubr.f32.mxu0 0.0
    %589 = vmatmul.mubr.f32.gmra.mxu0 %v485
    %v590 = vpop.f32.mrf.mxu0
    %v591 = vadd.f32 %v522, %v590
    %v592 = vpop.f32.mrf.mxu0
    %593 = vmatprep.mubr.f32.mxu0 0.0
    %594 = vmatmul.mubr.f32.gmra.mxu0 %v486
    %v595 = vpop.f32.mrf.mxu0
    %v596 = vadd.f32 %v522, %v595
    %v597 = vpop.f32.mrf.mxu0
    %598 = vmatprep.mubr.f32.mxu0 0.0
    %599 = vmatmul.mubr.f32.gmra.mxu0 %v487
    %v600 = vpop.f32.mrf.mxu0
    %v601 = vadd.f32 %v522, %v600
    %v602 = vpop.f32.mrf.mxu0
    %603 = vmatprep.mubr.f32.mxu0 0.0
    %604 = vmatmul.mubr.f32.gmra.mxu0 %v488
    %v605 = vpop.f32.mrf.mxu0
    %v606 = vadd.f32 %v522, %v605
    %v607 = vpop.f32.mrf.mxu0
    %608 = vmatprep.mubr.f32.mxu0 0.0
    %609 = vmatmul.mubr.f32.gmra.mxu0 %v489
    %v610 = vpop.f32.mrf.mxu0
    %v611 = vadd.f32 %v522, %v610
    %v612 = vpop.f32.mrf.mxu0
    %613 = vmatprep.mubr.f32.mxu0 0.0
    %614 = vmatmul.mubr.f32.gmra.mxu0 %v490
    %v615 = vpop.f32.mrf.mxu0
    %v616 = vadd.f32 %v522, %v615
    %v617 = vpop.f32.mrf.mxu0
    %618 = vmatprep.mubr.f32.mxu0 0.0
    %619 = vmatmul.mubr.f32.gmra.mxu0 %v491
    %v620 = vpop.f32.mrf.mxu0
    %v621 = vadd.f32 %v522, %v620
    %v622 = vpop.f32.mrf.mxu0
    %623 = vmatprep.mubr.f32.mxu0 0.0
    %624 = vmatmul.mubr.f32.gmra.mxu0 %v492
    %v625 = vpop.f32.mrf.mxu0
    %v626 = vadd.f32 %v522, %v625
    %v627 = vpop.f32.mrf.mxu0
    %628 = vmatprep.mubr.f32.mxu0 0.0
    %629 = vmatmul.mubr.f32.gmra.mxu0 %v493
    %v630 = vpop.f32.mrf.mxu0
    %v631 = vadd.f32 %v522, %v630
    %v632 = vpop.f32.mrf.mxu0
    %633 = vmatprep.mubr.f32.mxu0 0.0
    %634 = vmatmul.mubr.f32.gmra.mxu0 %v494
    %v635 = vpop.f32.mrf.mxu0
    %v636 = vadd.f32 %v522, %v635
    %v637 = vpop.f32.mrf.mxu0
    %638 = vmatprep.mubr.f32.mxu0 0.0
    %639 = vmatmul.mubr.f32.gmra.mxu0 %v495
    %v640 = vpop.f32.mrf.mxu0
    %v641 = vadd.f32 %v522, %v640
    %v642 = vpop.f32.mrf.mxu0
    %643 = vmatprep.mubr.f32.mxu0 0.0
    %644 = vmatmul.mubr.f32.gmra.mxu0 %v496
    %v645 = vpop.f32.mrf.mxu0
    %v646 = vadd.f32 %v522, %v645
    %v647 = vpop.f32.mrf.mxu0
    %648 = vmatprep.mubr.f32.mxu0 0.0
    %649 = vmatmul.mubr.f32.gmra.mxu0 %v497
    %v650 = vpop.f32.mrf.mxu0
    %v651 = vadd.f32 %v522, %v650
    %v652 = vpop.f32.mrf.mxu0
    %653 = vmatprep.mubr.f32.mxu0 0.0
    %654 = vmatmul.mubr.f32.gmra.mxu0 %v498
    %v655 = vpop.f32.mrf.mxu0
    %v656 = vadd.f32 %v522, %v655
    %v657 = vpop.f32.mrf.mxu0
    %658 = vmatprep.mubr.f32.mxu0 0.0
    %659 = vmatmul.mubr.f32.gmra.mxu0 %v499
    %v660 = vpop.f32.mrf.mxu0
    %v661 = vadd.f32 %v522, %v660
    %v662 = vpop.f32.mrf.mxu0
    %663 = vmatprep.mubr.f32.mxu0 0.0
    %664 = vmatmul.mubr.f32.gmra.mxu0 %v500
    %v665 = vpop.f32.mrf.mxu0
    %v666 = vadd.f32 %v522, %v665
    %v667 = vpop.f32.mrf.mxu0
    %668 = vdwg.mxu0
    %669 = vst.msk [vmem:[#allocation7] sm:$0xff] %vm75, %v591
    %670 = vst.msk [vmem:[#allocation7 + $0x8] sm:$0xff] %vm75, %v596
    %671 = vst.msk [vmem:[#allocation7 + $0x10] sm:$0xff] %vm75, %v601
    %672 = vst.msk [vmem:[#allocation7 + $0x18] sm:$0xff] %vm75, %v606
    %673 = vst.msk [vmem:[#allocation7 + $0x20] sm:$0xff] %vm75, %v611
    %674 = vst.msk [vmem:[#allocation7 + $0x28] sm:$0xff] %vm75, %v616
    %675 = vst.msk [vmem:[#allocation7 + $0x30] sm:$0xff] %vm75, %v621
    %676 = vst.msk [vmem:[#allocation7 + $0x38] sm:$0xff] %vm75, %v626
    %677 = vst.msk [vmem:[#allocation7 + $0x40] sm:$0xff] %vm75, %v631
    %678 = vst.msk [vmem:[#allocation7 + $0x48] sm:$0xff] %vm75, %v636
    %679 = vst.msk [vmem:[#allocation7 + $0x50] sm:$0xff] %vm75, %v641
    %680 = vst.msk [vmem:[#allocation7 + $0x58] sm:$0xff] %vm75, %v646
    %681 = vst.msk [vmem:[#allocation7 + $0x60] sm:$0xff] %vm75, %v651
    %682 = vst.msk [vmem:[#allocation7 + $0x68] sm:$0xff] %vm75, %v656
    %683 = vst.msk [vmem:[#allocation7 + $0x70] sm:$0xff] %vm75, %v661
    %684 = vst.msk [vmem:[#allocation7 + $0x78] sm:$0xff] %vm75, %v666
    // Predicated region
    $region38: #{tpu_custom_call.1} parent=1 // pred_check
      _
    $region39: #{tpu_custom_call.1} parent=1 // pred_check_branch
      %686 = sbr.rel (0) target = $region41
    $region40: #{tpu_custom_call.1} parent=1 // pred_region
      %s688 = ssub.s32 2048, 128
      %689 = vsyncadd [#allocation4], %s688
      %s690 = sshll.u32 [#allocation7], 4
      %s691 = int_to_ptr.vmem [resolvable:$true] %s690
      %696 = dma.vmem_to_hbm [thread:$0]  %s691, 128, %s7, [#allocation4], 128, 128, 8
    $region41: #{tpu_custom_call.1} parent=1 // pred_fallthru
      _
    // Predicated region
    $region42: #{tpu_custom_call.1} parent=1 // pred_check
      _
    $region43: #{tpu_custom_call.1} parent=1 // pred_check_branch
      %698 = sbr.rel (0) target = $region45
    $region44: #{tpu_custom_call.1} parent=1 // pred_region
      %699 = dma.done [#allocation4], 2048
    $region45: #{tpu_custom_call.1} parent=1 // pred_fallthru
      _
    %700 = vsyncpa [#allocation3], 1
    %701 = vsyncpa [#allocation6], 1
    %702 = vsyncpa [#allocation4], 1

</llo_original>
